<compile_context>
chip_gen: v7x
topology: tpu7x:2x2x1
jax: 0.10.0
libtpu: 0.0.40
codegen_flags: <defaults>
</compile_context>

<pallas_src>
import jax
import jax.numpy as jnp
from jax.experimental import pallas as pl
from jax.experimental.pallas import tpu as pltpu


def _sepconv_matmul_kernel(w_ref, s_ref, o_ref):
    """One fused depthwise+pointwise contraction for a block of images.

    w_ref : (F, K_pad)            fused weights (bias folded in column K)
    s_ref : (K_pad, imgs*P_pad)   lane-dense im2col slab block
    o_ref : (F, imgs*P_pad)       lane-dense output block
    """
    o_ref[...] = jax.lax.dot_general(
        w_ref[...], s_ref[...],
        dimension_numbers=(((1,), (0,)), ((), ())),
        preferred_element_type=jnp.float32).astype(o_ref.dtype)


def separable_conv2d(x_nchw, w_dw, b_dw, w_pw, b_pw, *, padding):
    """Forward pass matching the PyTorch SeparableConv2d module.

    x_nchw: (N, C, H, W)
    w_dw  : (C, 1, KH, KW)   depthwise Conv2d weight (groups=C)
    b_dw  : (C,)             depthwise bias
    w_pw  : (F, C, 1, 1)     pointwise Conv2d weight
    b_pw  : (F,)             pointwise bias
    returns (N, F, Ho, Wo)   (stride=1, dilation=1 only)
    """
    N, C, H, W = x_nchw.shape
    KH, KW = w_dw.shape[-2:]
    F = w_pw.shape[0]
    assert w_dw.shape[:2] == (C, 1), "depthwise weight must be (C,1,KH,KW)"
    assert w_pw.shape == (F, C, 1, 1), "pointwise weight must be (F,C,1,1)"
    # TODO(synk): stride/dilation other than 1 are not supported by this path.

    Hp, Wp = H + 2 * padding, W + 2 * padding
    Ho, Wo = Hp - KH + 1, Wp - KW + 1
    T = KH * KW
    K = T * C                                      # real contraction depth
    K_pad = ((K + 1 + 7) // 8) * 8                 # +1 bias row, pad to x8
    P = Ho * Wo
    P_pad = ((P + 127) // 128) * 128               # lane-align per-image cols

    # ---- Wrapper glue (XLA): im2col into a lane-dense (K_pad, N*P_pad) slab.
    x = x_nchw.astype(jnp.float32)                                 # NCHW
    xp = jnp.pad(x, ((0, 0), (0, 0), (padding, padding), (padding, padding)))
    taps = []
    for kh in range(KH):
        for kw in range(KW):
            taps.append(xp[:, :, kh:kh + Ho, kw:kw + Wo])          # (N,C,Ho,Wo)
    patches = jnp.stack(taps, axis=2)                              # (N,C,T,Ho,Wo)
    # Row index k = c*T + t (must match w_comb below); columns = n*P_pad + p.
    cols = jnp.transpose(patches, (1, 2, 0, 3, 4)).reshape(K, N, P)
    if P_pad != P:
        cols = jnp.pad(cols, ((0, 0), (0, 0), (0, P_pad - P)))
    rows = [cols, jnp.ones((1, N, P_pad), jnp.float32)]            # bias row
    if K_pad - K - 1 > 0:
        rows.append(jnp.zeros((K_pad - K - 1, N, P_pad), jnp.float32))
    slab = jnp.concatenate(rows, axis=0).reshape(K_pad, N * P_pad)

    # ---- Fused weights: W_comb[f, c*T + t] = w_pw[f,c] * w_dw[c,kh,kw];
    #      bias folded as column K: b_comb = w_pw @ b_dw + b_pw.
    wdw = w_dw.reshape(C, T).astype(jnp.float32)                   # (C, T)
    wpw = w_pw.reshape(F, C).astype(jnp.float32)                   # (F, C)
    fused = (wpw[:, :, None] * wdw[None, :, :]).reshape(F, K)      # (F, K)
    b_comb = wpw @ b_dw.astype(jnp.float32) + b_pw.astype(jnp.float32)
    w_full = jnp.zeros((F, K_pad), jnp.float32)
    w_full = w_full.at[:, :K].set(fused)
    w_full = w_full.at[:, K].set(b_comb)

    # ---- Images per grid step: padded-tile VMEM accounting, double buffered.
    F_pad = max(((F + 7) // 8) * 8, 8)
    blk_bytes_per_img = 4 * (K_pad * P_pad + F_pad * P_pad)        # slab + out
    budget = 8 << 20                                               # per-call blocks
    cap = max(1, min(16, N, budget // max(2 * blk_bytes_per_img, 1)))
    imgs = 1
    for cand in range(cap, 0, -1):
        if N % cand:
            continue
        g = N // cand
        if g >= 2 and g % 2 == 0:        # even #steps: both v7x TCs stay busy
            imgs = cand
            break
        if imgs == 1 and g >= 2:         # fallback: any >=2-step divisor
            imgs = cand
    grid_n = N // imgs

    out_flat = pl.pallas_call(
        _sepconv_matmul_kernel,
        out_shape=jax.ShapeDtypeStruct((F, N * P_pad), jnp.float32),
        grid=(grid_n,),
        in_specs=[
            pl.BlockSpec((F, K_pad), lambda n: (0, 0)),            # resident
            pl.BlockSpec((K_pad, imgs * P_pad), lambda n: (0, n)),
        ],
        out_specs=pl.BlockSpec((F, imgs * P_pad), lambda n: (0, n)),
        compiler_params=pltpu.CompilerParams(
            dimension_semantics=("parallel",),
            vmem_limit_bytes=32 << 20),
    )(w_full, slab)

    # ---- Glue: drop lane padding, back to NCHW (small wrapper-side transpose).
    out = out_flat.reshape(F, N, P_pad)[:, :, :P].reshape(F, N, Ho, Wo)
    return jnp.transpose(out, (1, 0, 2, 3)).astype(x_nchw.dtype)


def _reference(x, w_dw, b_dw, w_pw, b_pw, padding):
    """Pure-JAX reference (lax.conv) replicating nn.Conv2d semantics."""
    dw = jax.lax.conv_general_dilated(
        x, w_dw, window_strides=(1, 1),
        padding=((padding, padding), (padding, padding)),
        dimension_numbers=("NCHW", "OIHW", "NCHW"),
        feature_group_count=x.shape[1])
    dw = dw + b_dw[None, :, None, None]
    pw = jax.lax.conv_general_dilated(
        dw, w_pw, window_strides=(1, 1), padding="VALID",
        dimension_numbers=("NCHW", "OIHW", "NCHW"))
    return pw + b_pw[None, :, None, None]


if __name__ == "__main__":
    # SeparableConv2d(in_channels=4, filters=8, kernel_size=3, padding=1, bias=True)
    N, C, H, W = 2, 4, 16, 16
    F, KSIZE, PAD = 8, 3, 1

    key = jax.random.PRNGKey(0)
    kx, kdw, kbdw, kpw, kbpw = jax.random.split(key, 5)

    x = jax.random.normal(kx, (N, C, H, W), dtype=jnp.float32)
    w_dw = jax.random.normal(kdw, (C, 1, KSIZE, KSIZE), dtype=jnp.float32) * 0.1
    b_dw = jax.random.normal(kbdw, (C,), dtype=jnp.float32) * 0.1
    w_pw = jax.random.normal(kpw, (F, C, 1, 1), dtype=jnp.float32) * 0.1
    b_pw = jax.random.normal(kbpw, (F,), dtype=jnp.float32) * 0.1

    out = separable_conv2d(x, w_dw, b_dw, w_pw, b_pw, padding=PAD)
    out = jax.block_until_ready(out)

    ref = _reference(x, w_dw, b_dw, w_pw, b_pw, PAD)
    assert out.shape == (N, F, H, W), out.shape
    # Fused weights reassociate the (kh,kw,c) summation; differences vs. the
    # two-stage reference stay at f32 rounding level.
    err = float(jnp.max(jnp.abs(out - ref)))
    assert jnp.allclose(out, ref, atol=1e-4, rtol=1e-4), err

    print("KERNEL_OK")
</pallas_src>

<mosaic_0001>
module attributes {stable_mosaic.version = 11 : i64} {
  func.func @_sepconv_matmul_kernel(%arg0: i32, %arg1: memref<8x40xf32, #tpu.memory_space<vmem>>, %arg2: memref<40x256xf32, #tpu.memory_space<vmem>>, %arg3: memref<8x256xf32, #tpu.memory_space<vmem>>) attributes {dimension_semantics = [#tpu.dimension_semantics<parallel>], iteration_bounds = array<i64: 2>, scalar_prefetch = 0 : i64, scratch_operands = 0 : i64, tpu.core_type = #tpu.core_type<tc>, window_params = [{pipeline_mode = #tpu.pipeline_mode<synchronous>, transform_indices = @transform_0, window_bounds = array<i64: 8, 40>}, {transform_indices = @transform_1, window_bounds = array<i64: 40, 256>}, {transform_indices = @transform_2, window_bounds = array<i64: 8, 256>}]} {
    %c0 = arith.constant 0 : index
    %c0_0 = arith.constant 0 : index
    %0 = vector.load %arg1[%c0, %c0_0] : memref<8x40xf32, #tpu.memory_space<vmem>>, vector<8x40xf32>
    %c0_1 = arith.constant 0 : index
    %c0_2 = arith.constant 0 : index
    %1 = vector.load %arg2[%c0_1, %c0_2] : memref<40x256xf32, #tpu.memory_space<vmem>>, vector<40x256xf32>
    %cst = arith.constant dense<0.000000e+00> : vector<8x256xf32>
    %2 = tpu.matmul %0, %1, %cst {dimension_numbers = #tpu.dot_dimension_numbers<[1], [0], [0], [1], [0, 0, 1, 1], [], []>} : vector<8x40xf32>, vector<40x256xf32>, vector<8x256xf32> -> vector<8x256xf32>
    %c0_3 = arith.constant 0 : index
    %c0_4 = arith.constant 0 : index
    %3 = vector.load %arg3[%c0_3, %c0_4] : memref<8x256xf32, #tpu.memory_space<vmem>>, vector<8x256xf32>
    tpu.vector_store %arg3[%c0_3, %c0_4], %2 {strides = array<i32>} : memref<8x256xf32, #tpu.memory_space<vmem>>, vector<8x256xf32>,
    return
  }
  func.func @transform_0(%arg0: i32) -> (i32, i32) {
    %c0_i32 = arith.constant 0 : i32
    %c0_i32_0 = arith.constant 0 : i32
    %c0_i32_1 = arith.constant 0 : i32
    return %c0_i32, %c0_i32_0 : i32, i32
  }
  func.func @transform_1(%arg0: i32) -> (i32, i32) {
    %c0_i32 = arith.constant 0 : i32
    %c0_i32_0 = arith.constant 0 : i32
    return %c0_i32, %arg0 : i32, i32
  }
  func.func @transform_2(%arg0: i32) -> (i32, i32) {
    %c0_i32 = arith.constant 0 : i32
    %c0_i32_0 = arith.constant 0 : i32
    return %c0_i32, %arg0 : i32, i32
  }
}

</mosaic_0001>

<llo_original>
// kernel: tpu_custom_call.1
$region0: #{tpu_custom_call.1}
  #allocation0 [shape = 'u32[]', space=smem, size = 0x4, offset = 0x4, fixed_abs, tag = 'smem constant byte address 0x4 - core index']
  #allocation1 [shape = 'u32[144,128]{1,0:T(1,128)}', space=vmem, size = 0x12000, scoped, tag = 'internal scratch']
  %s0 = inlined_call_operand.hbm [shape: f32[8,40], index: 0, kind: input, shape index: {}]
  %s1 = inlined_call_operand.hbm [shape: f32[40,512], index: 1, kind: input, shape index: {}]
  %s2 = inlined_call_operand.hbm [shape: f32[8,512], index: 2, kind: output, shape index: {}]
  %s3 = sld [smem:[#allocation0]]
  $region49: #{tpu_custom_call.1} parent=0
    _
  %s5 = ssub.s32 1, %s3
  %s6 = scalar_select 0, %s5, %s3
  $region1: #{tpu_custom_call.1} parent=0
    #allocation2 [shape = 'u8[4096]{0}', space=vmem, size = 0x1000, scoped, tag = 'input window, operand 0, single buffered']
    #allocation3 [shape = 's32[2]{0}', space=sflag, size = 0x8, scoped, tag = 'scoped memory for tpu_custom_call.1']
    #allocation4 [shape = 's32[2]{0}', space=sflag, size = 0x8, scoped, tag = 'scoped memory for tpu_custom_call.1']
    #allocation5 [shape = 'u8[81920]{0}', space=vmem, size = 0x14000, scoped, tag = 'input window, operand 1']
    #allocation6 [shape = 's32[2]{0}', space=sflag, size = 0x8, scoped, tag = 'scoped memory for tpu_custom_call.1']
    #allocation7 [shape = 'u8[16384]{0}', space=vmem, size = 0x4000, scoped, tag = 'output window, operand 0']
    %7 = vsyncpa [#allocation3], 0
    %8 = vsyncpa [#allocation6], 0
    %s9 = scalar_lea.sflag [#allocation6], 1
    %10 = vsyncpa %s9, 0
    %11 = vsyncpa [#allocation4], 0
    %s12 = scalar_lea.sflag [#allocation4], 1
    %13 = vsyncpa %s12, 0
    loop: start=0, step=1, limit=4
    $region2: #{tpu_custom_call.1} parent=1 // loop_pre_header
      _
    $region3: #{tpu_custom_call.1} parent=1 // loop_header
      %s15 = sphi 0, %s19
      %p16 = scmp.ge.s32.totalorder %s15, 4
      %s23 = sphi 0, %s23
      %s25 = sphi 0, %s23
      %s26 = sphi 0, %s25
      %s40 = sphi 0, %s26
      %s46 = sphi 0, %s48
      %s49 = sphi 0, %s46
      %s50 = sphi 0, %s49
      %s66 = sphi 0, %s50
      %s72 = sphi 0, %s74
      %s75 = sphi 0, %s72
      %s76 = sphi 0, %s75
      %s92 = sphi 0, %s76
    $region4: #{tpu_custom_call.1} parent=1 // loop_header_branch
      %18 = sbr.rel (%p16) target = $region8
    $region5: #{tpu_custom_call.1} parent=1 // loop_body
      %s20 = ssub.s32 %s15, 1
      %s21 = ssub.s32 %s15, 2
      %s22 = sadd.s32 %s15, 1
      %s24 = sadd.s32 %s23, 1
      %p27 = scmp.eq.s32.totalorder %s15, 1
      %p28 = scmp.ne.s32.totalorder %s23, %s25
      %p29 = scmp.eq.s32.totalorder %s15, 0
      %p30 = por %p28, %p29
      %p31 = scmp.ne.s32.totalorder %s23, %s25
      %p32 = scmp.eq.s32.totalorder %s20, 1
      %p33 = por %p31, %p32
      %p34 = scmp.ne.s32.totalorder %s25, %s26
      %p35 = scmp.eq.s32.totalorder %s20, 0
      %p36 = por %p34, %p35
      %p37 = scmp.ne.s32.totalorder %s25, %s26
      %p38 = scmp.eq.s32.totalorder %s21, 1
      %p39 = por %p37, %p38
      %p41 = scmp.ne.s32.totalorder %s26, %s40
      %p42 = scmp.eq.s32.totalorder %s21, 0
      %p43 = por %p41, %p42
      %s44 = ssub.s32 %s15, %s22
      %p45 = scmp.eq.s32.totalorder %s44, 0
      %s47 = sadd.s32 %s46, 1
      %s48 = scalar_select %p45, %s46, %s47
      %p51 = pneg %p45
      %p52 = scmp.eq.s32.totalorder %s15, 1
      %p53 = por %p51, %p52
      %p54 = scmp.ne.s32.totalorder %s46, %s49
      %p55 = scmp.eq.s32.totalorder %s15, 0
      %p56 = por %p54, %p55
      %p57 = scmp.ne.s32.totalorder %s46, %s49
      %p58 = scmp.eq.s32.totalorder %s20, 1
      %p59 = por %p57, %p58
      %p60 = scmp.ne.s32.totalorder %s49, %s50
      %p61 = scmp.eq.s32.totalorder %s20, 0
      %p62 = por %p60, %p61
      %p63 = scmp.ne.s32.totalorder %s49, %s50
      %p64 = scmp.eq.s32.totalorder %s21, 1
      %p65 = por %p63, %p64
      %p67 = scmp.ne.s32.totalorder %s50, %s66
      %p68 = scmp.eq.s32.totalorder %s21, 0
      %p69 = por %p67, %p68
      %s70 = ssub.s32 %s15, %s22
      %p71 = scmp.eq.s32.totalorder %s70, 0
      %s73 = sadd.s32 %s72, 1
      %s74 = scalar_select %p71, %s72, %s73
      %p77 = pneg %p71
      %p78 = scmp.eq.s32.totalorder %s15, 1
      %p79 = por %p77, %p78
      %p80 = scmp.ne.s32.totalorder %s72, %s75
      %p81 = scmp.eq.s32.totalorder %s15, 0
      %p82 = por %p80, %p81
      %p83 = scmp.ne.s32.totalorder %s72, %s75
      %p84 = scmp.eq.s32.totalorder %s20, 1
      %p85 = por %p83, %p84
      %p86 = scmp.ne.s32.totalorder %s75, %s76
      %p87 = scmp.eq.s32.totalorder %s20, 0
      %p88 = por %p86, %p87
      %p89 = scmp.ne.s32.totalorder %s75, %s76
      %p90 = scmp.eq.s32.totalorder %s21, 1
      %p91 = por %p89, %p90
      %p93 = scmp.ne.s32.totalorder %s76, %s92
      %p94 = scmp.eq.s32.totalorder %s21, 0
      %p95 = por %p93, %p94
      %p96 = scmp.le.s32.totalorder 1, %s15
      %p97 = scmp.lt.s32.totalorder %s15, 3
      %p98 = pnand %p96, %p97
      %p99 = pneg %p98
      // Predicated region
      $region9: #{tpu_custom_call.1} parent=5 // pred_check
        _
      $region10: #{tpu_custom_call.1} parent=5 // pred_check_branch
        %101 = sbr.rel (%p98) target = $region12
      $region11: #{tpu_custom_call.1} parent=5 // pred_region
        %s102 = ssub.s32 %s15, 1
        // Predicated region
        $region13: #{tpu_custom_call.1} parent=11 // pred_check
          %p103 = pneg %p36
        $region14: #{tpu_custom_call.1} parent=11 // pred_check_branch
          %105 = sbr.rel (%p103) target = $region16
        $region15: #{tpu_custom_call.1} parent=11 // pred_region
          %s107 = ssub.s32 128, 128
          %108 = vsyncadd [#allocation3], %s107
          %s110 = sshll.u32 [#allocation2], 4
          %s111 = int_to_ptr.vmem [resolvable:$true] %s110
          %113 = dma.hbm_to_vmem [thread:$0]  %s0, 128, %s111, [#allocation3]
        $region16: #{tpu_custom_call.1} parent=11 // pred_fallthru
          _
      $region12: #{tpu_custom_call.1} parent=5 // pred_fallthru
        _
      %p114 = scmp.lt.s32.totalorder %s15, 2
      // Predicated region
      $region17: #{tpu_custom_call.1} parent=5 // pred_check
        %p115 = pneg %p114
      $region18: #{tpu_custom_call.1} parent=5 // pred_check_branch
        %117 = sbr.rel (%p115) target = $region20
      $region19: #{tpu_custom_call.1} parent=5 // pred_region
        // Predicated region
        $region21: #{tpu_custom_call.1} parent=19 // pred_check
          %p118 = pneg %p56
        $region22: #{tpu_custom_call.1} parent=19 // pred_check_branch
          %120 = sbr.rel (%p118) target = $region24
        $region23: #{tpu_custom_call.1} parent=19 // pred_region
          %s121 = sand.u32 %s46, 1
          %s122 = scalar_lea.sflag [#allocation6], %s121
          %s123 = sand.u32 %s46, 1
          %s124 = smul.addr %s123, 80
          %s125 = scalar_lea.vmem [#allocation5], %s124
          %s126 = smul.u32 2, %s15
          %s128 = ssub.s32 1280, 1280
          %129 = vsyncadd %s122, %s128
          %s130 = smul.addr %s126, 128
          %s131 = scalar_lea.hbm %s1, %s130
          %s132 = sshll.u32 %s125, 4
          %s133 = int_to_ptr.vmem [resolvable:$true] %s132
          %138 = dma.hbm_to_vmem [thread:$0]  %s131, 1280, %s133, %s122, 512, 256, 16
        $region24: #{tpu_custom_call.1} parent=19 // pred_fallthru
          _
      $region20: #{tpu_custom_call.1} parent=5 // pred_fallthru
        _
      %p139 = scmp.le.s32.totalorder 1, %s15
      %p140 = scmp.lt.s32.totalorder %s15, 3
      %p141 = pnand %p139, %p140
      %p142 = pneg %p141
      // Predicated region
      $region25: #{tpu_custom_call.1} parent=5 // pred_check
        _
      $region26: #{tpu_custom_call.1} parent=5 // pred_check_branch
        %144 = sbr.rel (%p141) target = $region28
      $region27: #{tpu_custom_call.1} parent=5 // pred_region
        %s145 = ssub.s32 %s15, 1
        // Predicated region
        $region29: #{tpu_custom_call.1} parent=27 // pred_check
          %p146 = pneg %p36
        $region30: #{tpu_custom_call.1} parent=27 // pred_check_branch
          %148 = sbr.rel (%p146) target = $region32
        $region31: #{tpu_custom_call.1} parent=27 // pred_region
          %149 = dma.done [#allocation3], 128
        $region32: #{tpu_custom_call.1} parent=27 // pred_fallthru
          _
        %s150 = sand.u32 %s49, 1
        %s151 = scalar_lea.sflag [#allocation6], %s150
        %s152 = sand.u32 %s49, 1
        %s153 = smul.addr %s152, 80
        %s154 = scalar_lea.vmem [#allocation5], %s153
        // Predicated region
        $region33: #{tpu_custom_call.1} parent=27 // pred_check
          %p155 = pneg %p62
        $region34: #{tpu_custom_call.1} parent=27 // pred_check_branch
          %157 = sbr.rel (%p155) target = $region36
        $region35: #{tpu_custom_call.1} parent=27 // pred_region
          %158 = dma.done %s151, 1280
        $region36: #{tpu_custom_call.1} parent=27 // pred_fallthru
          _
        %p159 = pneg %p36
        %p160 = pneg %p33
        %s161 = sand.u32 %s49, 1
        %s162 = scalar_lea.sflag [#allocation6], %s161
        %s163 = sand.u32 %s49, 1
        %s164 = smul.addr %s163, 80
        %s165 = scalar_lea.vmem [#allocation5], %s164
        %p166 = pneg %p62
        %p167 = pneg %p59
        %p168 = pneg %p88
        %p169 = pneg %p85
        %s170 = sand.u32 %s75, 1
        %s171 = scalar_lea.sflag [#allocation4], %s170
        %s172 = sand.u32 %s75, 1
        %s173 = smul.addr %s172, 16
        %s174 = scalar_lea.vmem [#allocation7], %s173
        %s175 = smul.u32 2, %s20
        %s176 = smul.u32 2, %s20
        %v177 = vld [vmem:[#allocation2] sm:$0xff]
        %v178 = vld [vmem:[%s154] sm:$0xff]
        %v179 = vld [vmem:[%s154 + $0x8] sm:$0xff]
        %v180 = vld [vmem:[%s154 + $0x10] sm:$0xff]
        %v181 = vld [vmem:[%s154 + $0x18] sm:$0xff]
        %v182 = vld [vmem:[%s154 + $0x20] sm:$0xff]
        %v183 = vld [vmem:[%s154 + $0x28] sm:$0xff]
        %v184 = vld [vmem:[%s154 + $0x30] sm:$0xff]
        %v185 = vld [vmem:[%s154 + $0x38] sm:$0xff]
        %v186 = vld [vmem:[%s154 + $0x40] sm:$0xff]
        %v187 = vld [vmem:[%s154 + $0x48] sm:$0xff]
        %vm188 = vcmask 326656
        %v190 = vsel %vm188, %v177, 0
        %192 = vmatprep.subr.mxu0 %v179
        %193 = vmatpush1.msra.mxu0 %v178
        %194 = vmatprep.subr.mxu0 %v181
        %195 = vmatpush1.msra.mxu0 %v180
        %196 = vmatprep.subr.mxu0 %v183
        %197 = vmatpush1.msra.mxu0 %v182
        %198 = vmatprep.subr.mxu0 %v185
        %199 = vmatpush1.msra.mxu0 %v184
        %200 = vmatprep.subr.mxu0 %v187
        %201 = vmatpush1.msra.mxu0 %v186
        %202 = vmatprep.subr.mxu0 0.0
        %203 = vmatpush1.msra.mxu0 0.0
        %204 = vmatprep.subr.mxu0 0.0
        %205 = vmatpush1.msra.mxu0 0.0
        %206 = vmatprep.subr.mxu0 0.0
        %207 = vmatpush1.msra.mxu0 0.0
        %208 = vmatprep.subr.mxu0 0.0
        %209 = vmatpush1.msra.mxu0 0.0
        %210 = vmatprep.subr.mxu0 0.0
        %211 = vmatpush1.msra.mxu0 0.0
        %212 = vmatprep.subr.mxu0 0.0
        %213 = vmatpush1.msra.mxu0 0.0
        %214 = vmatprep.subr.mxu0 0.0
        %215 = vmatpush1.msra.mxu0 0.0
        %216 = vmatprep.subr.mxu0 0.0
        %217 = vmatpush1.msra.mxu0 0.0
        %218 = vmatprep.subr.mxu0 0.0
        %219 = vmatpush1.msra.mxu0 0.0
        %220 = vmatprep.subr.mxu0 0.0
        %221 = vmatpush1.msra.mxu0 0.0
        %222 = vmatprep.subr.mxu0 0.0
        %223 = vmatpush1.msra.mxu0 0.0
        %224 = vmatprep.subr.mxu0 0.0
        %225 = vmatpush1.msra.mxu0 0.0
        %226 = vmatprep.subr.mxu0 0.0
        %227 = vmatpush1.msra.mxu0 0.0
        %228 = vmatprep.subr.mxu0 0.0
        %229 = vmatpush1.msra.mxu0 0.0
        %230 = vmatprep.subr.mxu0 0.0
        %231 = vmatpush1.msra.mxu0 0.0
        %232 = vmatprep.subr.mxu0 0.0
        %233 = vmatpush1.msra.mxu0 0.0
        %234 = vmatprep.subr.mxu0 0.0
        %235 = vmatpush1.msra.mxu0 0.0
        %236 = vmatprep.subr.mxu0 0.0
        %237 = vmatpush1.msra.mxu0 0.0
        %238 = vmatprep.subr.mxu0 0.0
        %239 = vmatpush1.msra.mxu0 0.0
        %240 = vmatprep.subr.mxu0 0.0
        %241 = vmatpush1.msra.mxu0 0.0
        %242 = vmatprep.subr.mxu0 0.0
        %243 = vmatpush1.msra.mxu0 0.0
        %244 = vmatprep.subr.mxu0 0.0
        %245 = vmatpush1.msra.mxu0 0.0
        %246 = vmatprep.subr.mxu0 0.0
        %247 = vmatpush1.msra.mxu0 0.0
        %248 = vmatprep.subr.mxu0 0.0
        %249 = vmatpush1.msra.mxu0 0.0
        %250 = vmatprep.subr.mxu0 0.0
        %251 = vmatpush1.msra.mxu0 0.0
        %252 = vmatprep.subr.mxu0 0.0
        %253 = vmatpush1.msra.mxu0 0.0
        %254 = vmatprep.subr.mxu0 0.0
        %255 = vmatpush1.msra.mxu0 0.0
        %256 = vmatprep.mubr.f32.mxu0 0.0
        %257 = vmatmul.mubr.f32.gmra.mrb[0].mxu0 %v190
        %v258 = vpop.f32.mrb[0].mxu0
        %v259 = vadd.f32 0.0, %v258
        %v260 = vpop.f32.mrb[0].mxu0
        %v261 = vadd.f32 0.0, %v260
        %262 = vdwg.mxu0
        %263 = vst [vmem:[%s174] sm:$0xff] %v259
        %264 = vst [vmem:[%s174 + $0x8] sm:$0xff] %v261
        %s265 = sand.u32 %s75, 1
        %s266 = scalar_lea.sflag [#allocation4], %s265
        %s267 = sand.u32 %s75, 1
        %s268 = smul.addr %s267, 16
        %s269 = scalar_lea.vmem [#allocation7], %s268
        // Predicated region
        $region37: #{tpu_custom_call.1} parent=27 // pred_check
          %p270 = pneg %p85
        $region38: #{tpu_custom_call.1} parent=27 // pred_check_branch
          %272 = sbr.rel (%p270) target = $region40
        $region39: #{tpu_custom_call.1} parent=27 // pred_region
          %s273 = smul.u32 2, %s20
          %s275 = ssub.s32 256, 256
          %276 = vsyncadd %s266, %s275
          %s277 = smul.addr %s273, 128
          %s278 = scalar_lea.hbm %s2, %s277
          %s280 = sshll.u32 %s269, 4
          %s281 = int_to_ptr.vmem [resolvable:$true] %s280
          %283 = dma.vmem_to_hbm [thread:$0]  %s281, 256, %s278, %s266
        $region40: #{tpu_custom_call.1} parent=27 // pred_fallthru
          _
      $region28: #{tpu_custom_call.1} parent=5 // pred_fallthru
        _
      %p284 = scmp.le.s32.totalorder 2, %s15
      // Predicated region
      $region41: #{tpu_custom_call.1} parent=5 // pred_check
        %p285 = pneg %p284
      $region42: #{tpu_custom_call.1} parent=5 // pred_check_branch
        %287 = sbr.rel (%p285) target = $region44
      $region43: #{tpu_custom_call.1} parent=5 // pred_region
        %s288 = ssub.s32 %s15, 2
        // Predicated region
        $region45: #{tpu_custom_call.1} parent=43 // pred_check
          %p289 = pneg %p91
        $region46: #{tpu_custom_call.1} parent=43 // pred_check_branch
          %291 = sbr.rel (%p289) target = $region48
        $region47: #{tpu_custom_call.1} parent=43 // pred_region
          %s292 = sand.u32 %s76, 1
          %s293 = scalar_lea.sflag [#allocation4], %s292
          %s294 = sand.u32 %s76, 1
          %s295 = smul.addr %s294, 16
          %s296 = scalar_lea.vmem [#allocation7], %s295
          %297 = dma.done %s293, 256
        $region48: #{tpu_custom_call.1} parent=43 // pred_fallthru
          _
      $region44: #{tpu_custom_call.1} parent=5 // pred_fallthru
        _
    $region6: #{tpu_custom_call.1} parent=1 // loop_footer
      %s19 = sadd.s32 1, %s15
    $region7: #{tpu_custom_call.1} parent=1 // loop_footer_branch
      %14 = sbr.rel target = $region3
    $region8: #{tpu_custom_call.1} parent=1 // loop_exit
      _
    %298 = vsyncpa [#allocation3], 1
    %s299 = scalar_lea.sflag [#allocation3], 1
    %300 = vsyncpa %s299, 1
    %301 = vsyncpa [#allocation6], 1
    %s302 = scalar_lea.sflag [#allocation6], 1
    %303 = vsyncpa %s302, 1
    %304 = vsyncpa [#allocation4], 1
    %s305 = scalar_lea.sflag [#allocation4], 1
    %306 = vsyncpa %s305, 1

</llo_original>
